<compile_context>
chip_gen: v5e
topology: v5e:2x2
jax: 0.10.0
libtpu: 0.0.40
codegen_flags: <defaults>
</compile_context>

<pallas_src>
import math

import jax
import jax.numpy as jnp
from jax.experimental import pallas as pl
from jax.experimental.pallas import tpu as pltpu


# ---------------------------------------------------------------------------
# Kernel: one GRU-agent step per grid iteration, weights resident in VMEM.
# ---------------------------------------------------------------------------
def rnn_agent_seq_kernel(x_ref, h0_ref,
                         fc1_w_ref, fc1_b_ref,
                         w_rz_ref, b_rz_ref,
                         w_in_ref, b_in_ref,
                         w_hn_ref, b_hn_ref,
                         fc2_w_ref, fc2_b_ref,
                         q_ref, h_out_ref,
                         h_scratch):
    t = pl.program_id(0)
    T = pl.num_programs(0)
    H = h0_ref.shape[-1]

    # Initialize the carried hidden state once.
    @pl.when(t == 0)
    def _():
        h_scratch[...] = h0_ref[...]

    h = h_scratch[...]                                   # (B, H)

    # fc1 + ReLU
    x = jnp.dot(x_ref[...], fc1_w_ref[...],
                preferred_element_type=jnp.float32) + fc1_b_ref[...]
    x = jnp.maximum(x, 0.0)                              # (B, H)

    # Fused r/z gates: [x | h] @ W_rz  (K = 2H = 128, one MXU pass),
    # biases (b_ih + b_hh) pre-folded at init.
    xh = jnp.concatenate([x, h], axis=-1)                # (B, 2H)
    rz = jax.nn.sigmoid(
        jnp.dot(xh, w_rz_ref[...], preferred_element_type=jnp.float32)
        + b_rz_ref[...])                                 # (B, 2H)
    r = rz[:, :H]
    z = rz[:, H:]

    # n gate (PyTorch GRUCell semantics: n = tanh(gi_n + r * gh_n)).
    gi_n = jnp.dot(x, w_in_ref[...],
                   preferred_element_type=jnp.float32) + b_in_ref[...]
    gh_n = jnp.dot(h, w_hn_ref[...],
                   preferred_element_type=jnp.float32) + b_hn_ref[...]
    n = jnp.tanh(gi_n + r * gh_n)

    h_new = (1.0 - z) * n + z * h
    h_scratch[...] = h_new

    # fc2 into a 128-lane-padded slab (lane-dense store).
    q = jnp.dot(h_new, fc2_w_ref[...],
                preferred_element_type=jnp.float32) + fc2_b_ref[...]
    q_ref[...] = q

    @pl.when(t == T - 1)
    def _():
        h_out_ref[...] = h_new


# ---------------------------------------------------------------------------
# Wrappers
# ---------------------------------------------------------------------------
def rnn_agent_rollout(x_seq, h0, params):
    """Run T GRU-agent steps in one pallas_call.

    x_seq: (T, B, input_shape), h0: (B, H).
    Returns (q_padded (T, B, A_PAD), h_final (B, H)).
    """
    T, B, I = x_seq.shape
    H = h0.shape[-1]
    A_pad = params["fc2_w_pad"].shape[1]

    def resident(shape):
        # Weight / h0 spec: constant block index -> DMA'd once, stays in VMEM.
        return pl.BlockSpec(shape, lambda t, _n=len(shape): (0,) * _n)

    grid_spec = pltpu.PrefetchScalarGridSpec(
        num_scalar_prefetch=0,
        grid=(T,),
        in_specs=[
            pl.BlockSpec((None, B, I), lambda t: (t, 0, 0)),   # x_t
            resident((B, H)),                                  # h0
            resident((I, H)), resident((1, H)),                # fc1
            resident((2 * H, 2 * H)), resident((1, 2 * H)),    # fused r/z
            resident((H, H)), resident((1, H)),                # w_in_n
            resident((H, H)), resident((1, H)),                # w_hn_n
            resident((H, A_pad)), resident((1, A_pad)),        # fc2 (padded)
        ],
        out_specs=[
            pl.BlockSpec((None, B, A_pad), lambda t: (t, 0, 0)),
            resident((B, H)),
        ],
        scratch_shapes=[pltpu.VMEM((B, H), jnp.float32)],
    )

    q_pad, h_final = pl.pallas_call(
        rnn_agent_seq_kernel,
        out_shape=(jax.ShapeDtypeStruct((T, B, A_pad), jnp.float32),
                   jax.ShapeDtypeStruct((B, H), jnp.float32)),
        grid_spec=grid_spec,
        compiler_params=pltpu.CompilerParams(
            dimension_semantics=("arbitrary",)),   # recurrent over t
    )(x_seq, h0,
      params["fc1_w"], params["fc1_b"],
      params["w_rz"], params["b_rz"],
      params["w_in"], params["b_in"],
      params["w_hn"], params["b_hn"],
      params["fc2_w_pad"], params["fc2_b_pad"])
    return q_pad, h_final


def rnn_agent_forward(inputs, hidden_state, params):
    """Exact equivalent of RNNAgent.forward (single step)."""
    H = params["fc1_w"].shape[1]
    A = params["n_actions"]
    q_pad, h = rnn_agent_rollout(inputs[None], hidden_state.reshape(-1, H), params)
    return q_pad[0, :, :A], h


# ---------------------------------------------------------------------------
# Params: base (PyTorch-like) init + kernel-layout repack (done once, at init).
# ---------------------------------------------------------------------------
def init_params(key, input_shape, hidden_dim, n_actions):
    """Deterministic init mirroring PyTorch default uniform(-1/sqrt(fan_in), ...)."""
    ks = jax.random.split(key, 8)

    def unif(k, shape, fan_in):
        bound = 1.0 / math.sqrt(fan_in)
        return jax.random.uniform(k, shape, jnp.float32, -bound, bound)

    H, I, A = hidden_dim, input_shape, n_actions
    return {
        # stored transposed: (in, out)
        "fc1_w": unif(ks[0], (I, H), I),
        "fc1_b": unif(ks[1], (1, H), I),
        "w_ih":  unif(ks[2], (H, 3 * H), H),   # [r|z|n] along out axis
        "b_ih":  unif(ks[3], (1, 3 * H), H),
        "w_hh":  unif(ks[4], (H, 3 * H), H),
        "b_hh":  unif(ks[5], (1, 3 * H), H),
        "fc2_w": unif(ks[6], (H, A), H),
        "fc2_b": unif(ks[7], (1, A), H),
    }


def pack_params(p, hidden_dim, n_actions):
    """Repack base params into the kernel layout (fused r/z, folded biases,
    lane-padded fc2).  Done once at init, never per call."""
    H, A = hidden_dim, n_actions
    A_pad = max(128, ((A + 127) // 128) * 128)
    w_ih, w_hh = p["w_ih"], p["w_hh"]
    b_ih, b_hh = p["b_ih"], p["b_hh"]
    return {
        "fc1_w": p["fc1_w"],
        "fc1_b": p["fc1_b"],
        # [x | h] @ w_rz == x @ w_ih[:, :2H] + h @ w_hh[:, :2H]
        "w_rz": jnp.concatenate([w_ih[:, :2 * H], w_hh[:, :2 * H]], axis=0),
        "b_rz": b_ih[:, :2 * H] + b_hh[:, :2 * H],
        "w_in": w_ih[:, 2 * H:], "b_in": b_ih[:, 2 * H:],
        "w_hn": w_hh[:, 2 * H:], "b_hn": b_hh[:, 2 * H:],
        "fc2_w_pad": jnp.pad(p["fc2_w"], ((0, 0), (0, A_pad - A))),
        "fc2_b_pad": jnp.pad(p["fc2_b"], ((0, 0), (0, A_pad - A))),
        "n_actions": A,
    }


# ---------------------------------------------------------------------------
# Pure-JAX reference (replicates the PyTorch forward exactly).
# ---------------------------------------------------------------------------
def reference_forward(inputs, hidden_state, p):
    H = p["fc1_w"].shape[1]
    x = jax.nn.relu(inputs @ p["fc1_w"] + p["fc1_b"])
    h = hidden_state.reshape(-1, H)
    gi = x @ p["w_ih"] + p["b_ih"]
    gh = h @ p["w_hh"] + p["b_hh"]
    r = jax.nn.sigmoid(gi[:, :H] + gh[:, :H])
    z = jax.nn.sigmoid(gi[:, H:2 * H] + gh[:, H:2 * H])
    n = jnp.tanh(gi[:, 2 * H:] + r * gh[:, 2 * H:])
    h_new = (1.0 - z) * n + z * h
    q = h_new @ p["fc2_w"] + p["fc2_b"]
    return q, h_new


if __name__ == "__main__":
    B, INPUT_SHAPE, HIDDEN, N_ACTIONS, T = 8, 48, 64, 12, 16

    key = jax.random.PRNGKey(0)
    k_x, k_h, k_p = jax.random.split(key, 3)

    x_seq = jax.random.normal(k_x, (T, B, INPUT_SHAPE), jnp.float32)
    hidden = jax.random.normal(k_h, (B, HIDDEN), jnp.float32)

    base_params = init_params(k_p, INPUT_SHAPE, HIDDEN, N_ACTIONS)
    params = pack_params(base_params, HIDDEN, N_ACTIONS)

    # --- single step: exact nn.Module.forward semantics -------------------
    q1, h1 = rnn_agent_forward(x_seq[0], hidden, params)
    q1, h1 = jax.block_until_ready((q1, h1))
    q1_ref, h1_ref = reference_forward(x_seq[0], hidden, base_params)
    assert q1.shape == (B, N_ACTIONS) and h1.shape == (B, HIDDEN)
    assert jnp.allclose(q1, q1_ref, atol=1e-4, rtol=1e-4)
    assert jnp.allclose(h1, h1_ref, atol=1e-4, rtol=1e-4)

    # --- T-step rollout in one pallas_call (amortized overhead path) ------
    q_pad, h_final = rnn_agent_rollout(x_seq, hidden, params)
    q_pad, h_final = jax.block_until_ready((q_pad, h_final))
    q_seq = q_pad[:, :, :N_ACTIONS]

    h_ref = hidden
    q_ref_steps = []
    for t in range(T):
        q_t, h_ref = reference_forward(x_seq[t], h_ref, base_params)
        q_ref_steps.append(q_t)
    q_ref_seq = jnp.stack(q_ref_steps, axis=0)

    assert q_seq.shape == (T, B, N_ACTIONS) and h_final.shape == (B, HIDDEN)
    assert jnp.allclose(q_seq, q_ref_seq, atol=1e-4, rtol=1e-4)
    assert jnp.allclose(h_final, h_ref, atol=1e-4, rtol=1e-4)

    print("KERNEL_OK")
</pallas_src>

<mosaic_0001>
module attributes {stable_mosaic.version = 11 : i64} {
  func.func @rnn_agent_seq_kernel(%arg0: i32, %arg1: memref<1x8x48xf32, #tpu.memory_space<vmem>>, %arg2: memref<8x64xf32, #tpu.memory_space<vmem>>, %arg3: memref<48x64xf32, #tpu.memory_space<vmem>>, %arg4: memref<1x64xf32, #tpu.memory_space<vmem>>, %arg5: memref<128x128xf32, #tpu.memory_space<vmem>>, %arg6: memref<1x128xf32, #tpu.memory_space<vmem>>, %arg7: memref<64x64xf32, #tpu.memory_space<vmem>>, %arg8: memref<1x64xf32, #tpu.memory_space<vmem>>, %arg9: memref<64x64xf32, #tpu.memory_space<vmem>>, %arg10: memref<1x64xf32, #tpu.memory_space<vmem>>, %arg11: memref<64x128xf32, #tpu.memory_space<vmem>>, %arg12: memref<1x128xf32, #tpu.memory_space<vmem>>, %arg13: memref<1x8x128xf32, #tpu.memory_space<vmem>>, %arg14: memref<8x64xf32, #tpu.memory_space<vmem>>, %arg15: memref<8x64xf32, #tpu.memory_space<vmem>>) attributes {dimension_semantics = [#tpu.dimension_semantics<arbitrary>], iteration_bounds = array<i64: 1>, scalar_prefetch = 0 : i64, scratch_operands = 1 : i64, tpu.core_type = #tpu.core_type<tc>, window_params = [{transform_indices = @transform_0, window_bounds = array<i64: 1, 8, 48>}, {pipeline_mode = #tpu.pipeline_mode<synchronous>, transform_indices = @transform_1, window_bounds = array<i64: 8, 64>}, {pipeline_mode = #tpu.pipeline_mode<synchronous>, transform_indices = @transform_2, window_bounds = array<i64: 48, 64>}, {pipeline_mode = #tpu.pipeline_mode<synchronous>, transform_indices = @transform_3, window_bounds = array<i64: 1, 64>}, {pipeline_mode = #tpu.pipeline_mode<synchronous>, transform_indices = @transform_4, window_bounds = array<i64: 128, 128>}, {pipeline_mode = #tpu.pipeline_mode<synchronous>, transform_indices = @transform_5, window_bounds = array<i64: 1, 128>}, {pipeline_mode = #tpu.pipeline_mode<synchronous>, transform_indices = @transform_6, window_bounds = array<i64: 64, 64>}, {pipeline_mode = #tpu.pipeline_mode<synchronous>, transform_indices = @transform_7, window_bounds = array<i64: 1, 64>}, {pipeline_mode = #tpu.pipeline_mode<synchronous>, transform_indices = @transform_8, window_bounds = array<i64: 64, 64>}, {pipeline_mode = #tpu.pipeline_mode<synchronous>, transform_indices = @transform_9, window_bounds = array<i64: 1, 64>}, {pipeline_mode = #tpu.pipeline_mode<synchronous>, transform_indices = @transform_10, window_bounds = array<i64: 64, 128>}, {pipeline_mode = #tpu.pipeline_mode<synchronous>, transform_indices = @transform_11, window_bounds = array<i64: 1, 128>}, {transform_indices = @transform_12, window_bounds = array<i64: 1, 8, 128>}, {pipeline_mode = #tpu.pipeline_mode<synchronous>, transform_indices = @transform_13, window_bounds = array<i64: 8, 64>}]} {
    %c0_i32 = arith.constant 0 : i32
    %0 = arith.cmpi eq, %arg0, %c0_i32 : i32
    %1 = arith.extui %0 : i1 to i32
    %c0_i32_0 = arith.constant 0 : i32
    %2 = arith.cmpi ne, %1, %c0_i32_0 : i32
    scf.if %2 {
      %c0_39 = arith.constant 0 : index
      %c0_40 = arith.constant 0 : index
      %56 = vector.load %arg2[%c0_39, %c0_40] : memref<8x64xf32, #tpu.memory_space<vmem>>, vector<8x64xf32>
      %c0_41 = arith.constant 0 : index
      %c0_42 = arith.constant 0 : index
      %57 = vector.load %arg15[%c0_41, %c0_42] : memref<8x64xf32, #tpu.memory_space<vmem>>, vector<8x64xf32>
      tpu.vector_store %arg15[%c0_41, %c0_42], %56 {strides = array<i32>} : memref<8x64xf32, #tpu.memory_space<vmem>>, vector<8x64xf32>,
    } else {
    }
    %c0 = arith.constant 0 : index
    %c0_1 = arith.constant 0 : index
    %3 = vector.load %arg15[%c0, %c0_1] : memref<8x64xf32, #tpu.memory_space<vmem>>, vector<8x64xf32>
    %c0_2 = arith.constant 0 : index
    %c0_3 = arith.constant 0 : index
    %c0_4 = arith.constant 0 : index
    %4 = vector.load %arg1[%c0_2, %c0_3, %c0_4] : memref<1x8x48xf32, #tpu.memory_space<vmem>>, vector<1x8x48xf32>
    %5 = vector.shape_cast %4 : vector<1x8x48xf32> to vector<8x48xf32>
    %c0_5 = arith.constant 0 : index
    %c0_6 = arith.constant 0 : index
    %6 = vector.load %arg3[%c0_5, %c0_6] : memref<48x64xf32, #tpu.memory_space<vmem>>, vector<48x64xf32>
    %cst = arith.constant dense<0.000000e+00> : vector<8x64xf32>
    %7 = tpu.matmul %5, %6, %cst {dimension_numbers = #tpu.dot_dimension_numbers<[1], [0], [0], [1], [0, 0, 1, 1], [], []>} : vector<8x48xf32>, vector<48x64xf32>, vector<8x64xf32> -> vector<8x64xf32>
    %c0_7 = arith.constant 0 : index
    %c0_8 = arith.constant 0 : index
    %8 = vector.load %arg4[%c0_7, %c0_8] : memref<1x64xf32, #tpu.memory_space<vmem>>, vector<1x64xf32>
    %9 = vector.broadcast %8 : vector<1x64xf32> to vector<8x64xf32>
    %10 = arith.addf %7, %9 : vector<8x64xf32>
    %cst_9 = arith.constant 0.000000e+00 : f32
    %11 = vector.broadcast %cst_9 : f32 to vector<8x64xf32>
    %12 = arith.maximumf %10, %11 : vector<8x64xf32>
    %13 = tpu.concatenate %12, %3 in 1 : vector<8x64xf32>, vector<8x64xf32> -> vector<8x128xf32>
    %c0_10 = arith.constant 0 : index
    %c0_11 = arith.constant 0 : index
    %14 = vector.load %arg5[%c0_10, %c0_11] : memref<128x128xf32, #tpu.memory_space<vmem>>, vector<128x128xf32>
    %cst_12 = arith.constant dense<0.000000e+00> : vector<8x128xf32>
    %15 = tpu.matmul %13, %14, %cst_12 {dimension_numbers = #tpu.dot_dimension_numbers<[1], [0], [0], [1], [0, 0, 1, 1], [], []>} : vector<8x128xf32>, vector<128x128xf32>, vector<8x128xf32> -> vector<8x128xf32>
    %c0_13 = arith.constant 0 : index
    %c0_14 = arith.constant 0 : index
    %16 = vector.load %arg6[%c0_13, %c0_14] : memref<1x128xf32, #tpu.memory_space<vmem>>, vector<1x128xf32>
    %17 = vector.broadcast %16 : vector<1x128xf32> to vector<8x128xf32>
    %18 = arith.addf %15, %17 : vector<8x128xf32>
    %19 = arith.negf %18 : vector<8x128xf32>
    %20 = math.exp %19 : vector<8x128xf32>
    %cst_15 = arith.constant 1.000000e+00 : f32
    %21 = vector.broadcast %cst_15 : f32 to vector<8x128xf32>
    %22 = arith.addf %21, %20 : vector<8x128xf32>
    %23 = arith.divf %21, %22 : vector<8x128xf32>
    %24 = vector.extract_strided_slice %23 {offsets = [0, 0], sizes = [8, 64], strides = [1, 1]} : vector<8x128xf32> to vector<8x64xf32>
    %25 = vector.extract_strided_slice %23 {offsets = [0, 64], sizes = [8, 64], strides = [1, 1]} : vector<8x128xf32> to vector<8x64xf32>
    %c0_16 = arith.constant 0 : index
    %c0_17 = arith.constant 0 : index
    %26 = vector.load %arg7[%c0_16, %c0_17] : memref<64x64xf32, #tpu.memory_space<vmem>>, vector<64x64xf32>
    %cst_18 = arith.constant dense<0.000000e+00> : vector<8x64xf32>
    %27 = tpu.matmul %12, %26, %cst_18 {dimension_numbers = #tpu.dot_dimension_numbers<[1], [0], [0], [1], [0, 0, 1, 1], [], []>} : vector<8x64xf32>, vector<64x64xf32>, vector<8x64xf32> -> vector<8x64xf32>
    %c0_19 = arith.constant 0 : index
    %c0_20 = arith.constant 0 : index
    %28 = vector.load %arg8[%c0_19, %c0_20] : memref<1x64xf32, #tpu.memory_space<vmem>>, vector<1x64xf32>
    %29 = vector.broadcast %28 : vector<1x64xf32> to vector<8x64xf32>
    %30 = arith.addf %27, %29 : vector<8x64xf32>
    %c0_21 = arith.constant 0 : index
    %c0_22 = arith.constant 0 : index
    %31 = vector.load %arg9[%c0_21, %c0_22] : memref<64x64xf32, #tpu.memory_space<vmem>>, vector<64x64xf32>
    %cst_23 = arith.constant dense<0.000000e+00> : vector<8x64xf32>
    %32 = tpu.matmul %3, %31, %cst_23 {dimension_numbers = #tpu.dot_dimension_numbers<[1], [0], [0], [1], [0, 0, 1, 1], [], []>} : vector<8x64xf32>, vector<64x64xf32>, vector<8x64xf32> -> vector<8x64xf32>
    %c0_24 = arith.constant 0 : index
    %c0_25 = arith.constant 0 : index
    %33 = vector.load %arg10[%c0_24, %c0_25] : memref<1x64xf32, #tpu.memory_space<vmem>>, vector<1x64xf32>
    %34 = vector.broadcast %33 : vector<1x64xf32> to vector<8x64xf32>
    %35 = arith.addf %32, %34 : vector<8x64xf32>
    %36 = arith.mulf %24, %35 : vector<8x64xf32>
    %37 = arith.addf %30, %36 : vector<8x64xf32>
    %38 = math.tanh %37 : vector<8x64xf32>
    %cst_26 = arith.constant 1.000000e+00 : f32
    %39 = vector.broadcast %cst_26 : f32 to vector<8x64xf32>
    %40 = arith.subf %39, %25 : vector<8x64xf32>
    %41 = arith.mulf %40, %38 : vector<8x64xf32>
    %42 = arith.mulf %25, %3 : vector<8x64xf32>
    %43 = arith.addf %41, %42 : vector<8x64xf32>
    %c0_27 = arith.constant 0 : index
    %c0_28 = arith.constant 0 : index
    %44 = vector.load %arg15[%c0_27, %c0_28] : memref<8x64xf32, #tpu.memory_space<vmem>>, vector<8x64xf32>
    tpu.vector_store %arg15[%c0_27, %c0_28], %43 {strides = array<i32>} : memref<8x64xf32, #tpu.memory_space<vmem>>, vector<8x64xf32>,
    %c0_29 = arith.constant 0 : index
    %c0_30 = arith.constant 0 : index
    %45 = vector.load %arg11[%c0_29, %c0_30] : memref<64x128xf32, #tpu.memory_space<vmem>>, vector<64x128xf32>
    %cst_31 = arith.constant dense<0.000000e+00> : vector<8x128xf32>
    %46 = tpu.matmul %43, %45, %cst_31 {dimension_numbers = #tpu.dot_dimension_numbers<[1], [0], [0], [1], [0, 0, 1, 1], [], []>} : vector<8x64xf32>, vector<64x128xf32>, vector<8x128xf32> -> vector<8x128xf32>
    %c0_32 = arith.constant 0 : index
    %c0_33 = arith.constant 0 : index
    %47 = vector.load %arg12[%c0_32, %c0_33] : memref<1x128xf32, #tpu.memory_space<vmem>>, vector<1x128xf32>
    %48 = vector.broadcast %47 : vector<1x128xf32> to vector<8x128xf32>
    %49 = arith.addf %46, %48 : vector<8x128xf32>
    %c0_34 = arith.constant 0 : index
    %c0_35 = arith.constant 0 : index
    %c0_36 = arith.constant 0 : index
    %50 = vector.load %arg13[%c0_34, %c0_35, %c0_36] : memref<1x8x128xf32, #tpu.memory_space<vmem>>, vector<1x8x128xf32>
    %51 = vector.shape_cast %50 : vector<1x8x128xf32> to vector<8x128xf32>
    %52 = vector.shape_cast %49 : vector<8x128xf32> to vector<1x8x128xf32>
    tpu.vector_store %arg13[%c0_34, %c0_35, %c0_36], %52 {strides = array<i32>} : memref<1x8x128xf32, #tpu.memory_space<vmem>>, vector<1x8x128xf32>,
    %c0_i32_37 = arith.constant 0 : i32
    %53 = arith.cmpi eq, %arg0, %c0_i32_37 : i32
    %54 = arith.extui %53 : i1 to i32
    %c0_i32_38 = arith.constant 0 : i32
    %55 = arith.cmpi ne, %54, %c0_i32_38 : i32
    scf.if %55 {
      %c0_39 = arith.constant 0 : index
      %c0_40 = arith.constant 0 : index
      %56 = vector.load %arg14[%c0_39, %c0_40] : memref<8x64xf32, #tpu.memory_space<vmem>>, vector<8x64xf32>
      tpu.vector_store %arg14[%c0_39, %c0_40], %43 {strides = array<i32>} : memref<8x64xf32, #tpu.memory_space<vmem>>, vector<8x64xf32>,
    } else {
    }
    return
  }
  func.func @transform_0(%arg0: i32) -> (i32, i32, i32) {
    %c0_i32 = arith.constant 0 : i32
    %c0_i32_0 = arith.constant 0 : i32
    %c0_i32_1 = arith.constant 0 : i32
    return %arg0, %c0_i32, %c0_i32_0 : i32, i32, i32
  }
  func.func @transform_1(%arg0: i32) -> (i32, i32) {
    %c0_i32 = arith.constant 0 : i32
    %c0_i32_0 = arith.constant 0 : i32
    %c0_i32_1 = arith.constant 0 : i32
    return %c0_i32, %c0_i32_0 : i32, i32
  }
  func.func @transform_2(%arg0: i32) -> (i32, i32) {
    %c0_i32 = arith.constant 0 : i32
    %c0_i32_0 = arith.constant 0 : i32
    %c0_i32_1 = arith.constant 0 : i32
    return %c0_i32, %c0_i32_0 : i32, i32
  }
  func.func @transform_3(%arg0: i32) -> (i32, i32) {
    %c0_i32 = arith.constant 0 : i32
    %c0_i32_0 = arith.constant 0 : i32
    %c0_i32_1 = arith.constant 0 : i32
    return %c0_i32, %c0_i32_0 : i32, i32
  }
  func.func @transform_4(%arg0: i32) -> (i32, i32) {
    %c0_i32 = arith.constant 0 : i32
    %c0_i32_0 = arith.constant 0 : i32
    %c0_i32_1 = arith.constant 0 : i32
    return %c0_i32, %c0_i32_0 : i32, i32
  }
  func.func @transform_5(%arg0: i32) -> (i32, i32) {
    %c0_i32 = arith.constant 0 : i32
    %c0_i32_0 = arith.constant 0 : i32
    %c0_i32_1 = arith.constant 0 : i32
    return %c0_i32, %c0_i32_0 : i32, i32
  }
  func.func @transform_6(%arg0: i32) -> (i32, i32) {
    %c0_i32 = arith.constant 0 : i32
    %c0_i32_0 = arith.constant 0 : i32
    %c0_i32_1 = arith.constant 0 : i32
    return %c0_i32, %c0_i32_0 : i32, i32
  }
  func.func @transform_7(%arg0: i32) -> (i32, i32) {
    %c0_i32 = arith.constant 0 : i32
    %c0_i32_0 = arith.constant 0 : i32
    %c0_i32_1 = arith.constant 0 : i32
    return %c0_i32, %c0_i32_0 : i32, i32
  }
  func.func @transform_8(%arg0: i32) -> (i32, i32) {
    %c0_i32 = arith.constant 0 : i32
    %c0_i32_0 = arith.constant 0 : i32
    %c0_i32_1 = arith.constant 0 : i32
    return %c0_i32, %c0_i32_0 : i32, i32
  }
  func.func @transform_9(%arg0: i32) -> (i32, i32) {
    %c0_i32 = arith.constant 0 : i32
    %c0_i32_0 = arith.constant 0 : i32
    %c0_i32_1 = arith.constant 0 : i32
    return %c0_i32, %c0_i32_0 : i32, i32
  }
  func.func @transform_10(%arg0: i32) -> (i32, i32) {
    %c0_i32 = arith.constant 0 : i32
    %c0_i32_0 = arith.constant 0 : i32
    %c0_i32_1 = arith.constant 0 : i32
    return %c0_i32, %c0_i32_0 : i32, i32
  }
  func.func @transform_11(%arg0: i32) -> (i32, i32) {
    %c0_i32 = arith.constant 0 : i32
    %c0_i32_0 = arith.constant 0 : i32
    %c0_i32_1 = arith.constant 0 : i32
    return %c0_i32, %c0_i32_0 : i32, i32
  }
  func.func @transform_12(%arg0: i32) -> (i32, i32, i32) {
    %c0_i32 = arith.constant 0 : i32
    %c0_i32_0 = arith.constant 0 : i32
    %c0_i32_1 = arith.constant 0 : i32
    return %arg0, %c0_i32, %c0_i32_0 : i32, i32, i32
  }
  func.func @transform_13(%arg0: i32) -> (i32, i32) {
    %c0_i32 = arith.constant 0 : i32
    %c0_i32_0 = arith.constant 0 : i32
    %c0_i32_1 = arith.constant 0 : i32
    return %c0_i32, %c0_i32_0 : i32, i32
  }
}

</mosaic_0001>

<llo_original>
// kernel: tpu_custom_call.1
$region0: #{tpu_custom_call.1}
  #allocation0 [shape = 'u32[]', space=smem, size = 0x4, offset = 0x4, fixed_abs, tag = 'smem constant byte address 0x4 - core index']
  #allocation1 [shape = 'u32[72,128]{1,0:T(1,128)}', space=vmem, size = 0x9000, scoped, tag = 'internal scratch']
  #allocation2 [shape = 'f32[8,64]{1,0:T(8,128)}', space=vmem, size = 0x1000, scoped, tag = 'scratch operand']
  %s0 = inlined_call_operand.hbm [shape: f32[1,8,48], index: 0, kind: input, shape index: {}]
  %s1 = inlined_call_operand.hbm [shape: f32[8,64], index: 1, kind: input, shape index: {}]
  %s2 = inlined_call_operand.hbm [shape: f32[48,64], index: 2, kind: input, shape index: {}]
  %s3 = inlined_call_operand.vmem [shape: f32[1,64], index: 3, kind: input, shape index: {}]
  %s4 = inlined_call_operand.hbm [shape: f32[128,128], index: 4, kind: input, shape index: {}]
  %s5 = inlined_call_operand.vmem [shape: f32[1,128], index: 5, kind: input, shape index: {}]
  %s6 = inlined_call_operand.hbm [shape: f32[64,64], index: 6, kind: input, shape index: {}]
  %s7 = inlined_call_operand.vmem [shape: f32[1,64], index: 7, kind: input, shape index: {}]
  %s8 = inlined_call_operand.hbm [shape: f32[64,64], index: 8, kind: input, shape index: {}]
  %s9 = inlined_call_operand.vmem [shape: f32[1,64], index: 9, kind: input, shape index: {}]
  %s10 = inlined_call_operand.hbm [shape: f32[64,128], index: 10, kind: input, shape index: {}]
  %s11 = inlined_call_operand.vmem [shape: f32[1,128], index: 11, kind: input, shape index: {}]
  %s12 = inlined_call_operand.hbm [shape: f32[1,8,128], index: 12, kind: output, shape index: {0}]
  %s13 = inlined_call_operand.hbm [shape: f32[8,64], index: 13, kind: output, shape index: {1}]
  %14 = xla_tuple %s12, %s13
  %s15 = sld [smem:[#allocation0]]
  $region102: #{tpu_custom_call.1} parent=0
    _
  %s17 = ssub.s32 1, %s15
  %s18 = scalar_select 0, %s17, %s15
  $region1: #{tpu_custom_call.1} parent=0
    #allocation3 [shape = 'u8[4096]{0}', space=vmem, size = 0x1000, scoped, tag = 'input window, operand 0, single buffered']
    #allocation4 [shape = 's32[1]{0}', space=sflag, size = 0x4, scoped, tag = 'scoped memory for tpu_custom_call.1']
    #allocation5 [shape = 's32[1]{0}', space=sflag, size = 0x4, scoped, tag = 'scoped memory for tpu_custom_call.1']
    #allocation6 [shape = 'u8[4096]{0}', space=vmem, size = 0x1000, scoped, tag = 'input window, operand 1, single buffered']
    #allocation7 [shape = 's32[1]{0}', space=sflag, size = 0x4, scoped, tag = 'scoped memory for tpu_custom_call.1']
    #allocation8 [shape = 'u8[24576]{0}', space=vmem, size = 0x6000, scoped, tag = 'input window, operand 2, single buffered']
    #allocation9 [shape = 'u8[65536]{0}', space=vmem, size = 0x10000, scoped, tag = 'input window, operand 4, single buffered']
    #allocation10 [shape = 's32[1]{0}', space=sflag, size = 0x4, scoped, tag = 'scoped memory for tpu_custom_call.1']
    #allocation11 [shape = 'u8[32768]{0}', space=vmem, size = 0x8000, scoped, tag = 'input window, operand 6, single buffered']
    #allocation12 [shape = 'u8[32768]{0}', space=vmem, size = 0x8000, scoped, tag = 'input window, operand 8, single buffered']
    #allocation13 [shape = 's32[1]{0}', space=sflag, size = 0x4, scoped, tag = 'scoped memory for tpu_custom_call.1']
    #allocation14 [shape = 'u8[32768]{0}', space=vmem, size = 0x8000, scoped, tag = 'input window, operand 10, single buffered']
    #allocation15 [shape = 'u8[4096]{0}', space=vmem, size = 0x1000, scoped, tag = 'output window, operand 0, single buffered']
    #allocation16 [shape = 'u8[4096]{0}', space=vmem, size = 0x1000, scoped, tag = 'output window, operand 1, single buffered']
    #allocation17 [shape = 's32[1]{0}', space=sflag, size = 0x4, scoped, tag = 'scoped memory for tpu_custom_call.1']
    %19 = vsyncpa [#allocation4], 0
    %20 = vsyncpa [#allocation7], 0
    %21 = vsyncpa [#allocation10], 0
    %22 = vsyncpa [#allocation13], 0
    %23 = vsyncpa [#allocation5], 0
    %24 = vsyncpa [#allocation17], 0
    // Predicated region
    $region2: #{tpu_custom_call.1} parent=1 // pred_check
      _
    $region3: #{tpu_custom_call.1} parent=1 // pred_check_branch
      %26 = sbr.rel (0) target = $region5
    $region4: #{tpu_custom_call.1} parent=1 // pred_region
      %28 = vsyncadd [#allocation4], 0
      %s30 = sshll.u32 %s0, 4
      %s31 = int_to_ptr.hbm [resolvable:$true] %s30
      %s32 = sshll.u32 [#allocation3], 4
      %s33 = int_to_ptr.vmem [resolvable:$true] %s32
      %35 = dma.hbm_to_vmem [thread:$0]  %s31, 128, %s33, [#allocation4]
    $region5: #{tpu_custom_call.1} parent=1 // pred_fallthru
      _
    // Predicated region
    $region6: #{tpu_custom_call.1} parent=1 // pred_check
      _
    $region7: #{tpu_custom_call.1} parent=1 // pred_check_branch
      %37 = sbr.rel (0) target = $region9
    $region8: #{tpu_custom_call.1} parent=1 // pred_region
      %39 = vsyncadd [#allocation7], 0
      %s41 = sshll.u32 %s1, 4
      %s42 = int_to_ptr.hbm [resolvable:$true] %s41
      %s43 = sshll.u32 [#allocation6], 4
      %s44 = int_to_ptr.vmem [resolvable:$true] %s43
      %46 = dma.hbm_to_vmem [thread:$0]  %s42, 128, %s44, [#allocation7]
    $region9: #{tpu_custom_call.1} parent=1 // pred_fallthru
      _
    // Predicated region
    $region10: #{tpu_custom_call.1} parent=1 // pred_check
      _
    $region11: #{tpu_custom_call.1} parent=1 // pred_check_branch
      %48 = sbr.rel (0) target = $region13
    $region12: #{tpu_custom_call.1} parent=1 // pred_region
      %50 = vsyncadd [#allocation7], 0
      %s51 = sshll.u32 %s2, 4
      %s52 = int_to_ptr.hbm [resolvable:$true] %s51
      %s53 = sshll.u32 [#allocation8], 4
      %s54 = int_to_ptr.vmem [resolvable:$true] %s53
      %59 = dma.hbm_to_vmem [thread:$0]  %s52, 768, %s54, [#allocation7], 128, 128, 8
    $region13: #{tpu_custom_call.1} parent=1 // pred_fallthru
      _
    // Predicated region
    $region14: #{tpu_custom_call.1} parent=1 // pred_check
      _
    $region15: #{tpu_custom_call.1} parent=1 // pred_check_branch
      %61 = sbr.rel (0) target = $region17
    $region16: #{tpu_custom_call.1} parent=1 // pred_region
      _
    $region17: #{tpu_custom_call.1} parent=1 // pred_fallthru
      _
    // Predicated region
    $region18: #{tpu_custom_call.1} parent=1 // pred_check
      _
    $region19: #{tpu_custom_call.1} parent=1 // pred_check_branch
      %63 = sbr.rel (0) target = $region21
    $region20: #{tpu_custom_call.1} parent=1 // pred_region
      %65 = vsyncadd [#allocation10], 0
      %s66 = sshll.u32 %s4, 4
      %s67 = int_to_ptr.hbm [resolvable:$true] %s66
      %s68 = sshll.u32 [#allocation9], 4
      %s69 = int_to_ptr.vmem [resolvable:$true] %s68
      %74 = dma.hbm_to_vmem [thread:$0]  %s67, 2048, %s69, [#allocation10], 128, 128, 8
    $region21: #{tpu_custom_call.1} parent=1 // pred_fallthru
      _
    // Predicated region
    $region22: #{tpu_custom_call.1} parent=1 // pred_check
      _
    $region23: #{tpu_custom_call.1} parent=1 // pred_check_branch
      %76 = sbr.rel (0) target = $region25
    $region24: #{tpu_custom_call.1} parent=1 // pred_region
      _
    $region25: #{tpu_custom_call.1} parent=1 // pred_fallthru
      _
    // Predicated region
    $region26: #{tpu_custom_call.1} parent=1 // pred_check
      _
    $region27: #{tpu_custom_call.1} parent=1 // pred_check_branch
      %78 = sbr.rel (0) target = $region29
    $region28: #{tpu_custom_call.1} parent=1 // pred_region
      %80 = vsyncadd [#allocation10], 0
      %s81 = sshll.u32 %s6, 4
      %s82 = int_to_ptr.hbm [resolvable:$true] %s81
      %s83 = sshll.u32 [#allocation11], 4
      %s84 = int_to_ptr.vmem [resolvable:$true] %s83
      %89 = dma.hbm_to_vmem [thread:$0]  %s82, 1024, %s84, [#allocation10], 128, 128, 8
    $region29: #{tpu_custom_call.1} parent=1 // pred_fallthru
      _
    // Predicated region
    $region30: #{tpu_custom_call.1} parent=1 // pred_check
      _
    $region31: #{tpu_custom_call.1} parent=1 // pred_check_branch
      %91 = sbr.rel (0) target = $region33
    $region32: #{tpu_custom_call.1} parent=1 // pred_region
      _
    $region33: #{tpu_custom_call.1} parent=1 // pred_fallthru
      _
    // Predicated region
    $region34: #{tpu_custom_call.1} parent=1 // pred_check
      _
    $region35: #{tpu_custom_call.1} parent=1 // pred_check_branch
      %93 = sbr.rel (0) target = $region37
    $region36: #{tpu_custom_call.1} parent=1 // pred_region
      %95 = vsyncadd [#allocation13], 0
      %s96 = sshll.u32 %s8, 4
      %s97 = int_to_ptr.hbm [resolvable:$true] %s96
      %s98 = sshll.u32 [#allocation12], 4
      %s99 = int_to_ptr.vmem [resolvable:$true] %s98
      %104 = dma.hbm_to_vmem [thread:$0]  %s97, 1024, %s99, [#allocation13], 128, 128, 8
    $region37: #{tpu_custom_call.1} parent=1 // pred_fallthru
      _
    // Predicated region
    $region38: #{tpu_custom_call.1} parent=1 // pred_check
      _
    $region39: #{tpu_custom_call.1} parent=1 // pred_check_branch
      %106 = sbr.rel (0) target = $region41
    $region40: #{tpu_custom_call.1} parent=1 // pred_region
      _
    $region41: #{tpu_custom_call.1} parent=1 // pred_fallthru
      _
    // Predicated region
    $region42: #{tpu_custom_call.1} parent=1 // pred_check
      _
    $region43: #{tpu_custom_call.1} parent=1 // pred_check_branch
      %108 = sbr.rel (0) target = $region45
    $region44: #{tpu_custom_call.1} parent=1 // pred_region
      %110 = vsyncadd [#allocation13], 0
      %s111 = sshll.u32 %s10, 4
      %s112 = int_to_ptr.hbm [resolvable:$true] %s111
      %s113 = sshll.u32 [#allocation14], 4
      %s114 = int_to_ptr.vmem [resolvable:$true] %s113
      %119 = dma.hbm_to_vmem [thread:$0]  %s112, 1024, %s114, [#allocation13], 128, 128, 8
    $region45: #{tpu_custom_call.1} parent=1 // pred_fallthru
      _
    // Predicated region
    $region46: #{tpu_custom_call.1} parent=1 // pred_check
      _
    $region47: #{tpu_custom_call.1} parent=1 // pred_check_branch
      %121 = sbr.rel (0) target = $region49
    $region48: #{tpu_custom_call.1} parent=1 // pred_region
      _
    $region49: #{tpu_custom_call.1} parent=1 // pred_fallthru
      _
    // Predicated region
    $region50: #{tpu_custom_call.1} parent=1 // pred_check
      _
    $region51: #{tpu_custom_call.1} parent=1 // pred_check_branch
      %123 = sbr.rel (0) target = $region53
    $region52: #{tpu_custom_call.1} parent=1 // pred_region
      %125 = dma.done [#allocation4], 128
    $region53: #{tpu_custom_call.1} parent=1 // pred_fallthru
      _
    // Predicated region
    $region54: #{tpu_custom_call.1} parent=1 // pred_check
      _
    $region55: #{tpu_custom_call.1} parent=1 // pred_check_branch
      %127 = sbr.rel (0) target = $region57
    $region56: #{tpu_custom_call.1} parent=1 // pred_region
      %129 = dma.done [#allocation7], 128
    $region57: #{tpu_custom_call.1} parent=1 // pred_fallthru
      _
    // Predicated region
    $region58: #{tpu_custom_call.1} parent=1 // pred_check
      _
    $region59: #{tpu_custom_call.1} parent=1 // pred_check_branch
      %131 = sbr.rel (0) target = $region61
    $region60: #{tpu_custom_call.1} parent=1 // pred_region
      %133 = dma.done [#allocation7], 768
    $region61: #{tpu_custom_call.1} parent=1 // pred_fallthru
      _
    // Predicated region
    $region62: #{tpu_custom_call.1} parent=1 // pred_check
      _
    $region63: #{tpu_custom_call.1} parent=1 // pred_check_branch
      %135 = sbr.rel (0) target = $region65
    $region64: #{tpu_custom_call.1} parent=1 // pred_region
      %137 = dma.done [#allocation10], 2048
    $region65: #{tpu_custom_call.1} parent=1 // pred_fallthru
      _
    // Predicated region
    $region66: #{tpu_custom_call.1} parent=1 // pred_check
      _
    $region67: #{tpu_custom_call.1} parent=1 // pred_check_branch
      %139 = sbr.rel (0) target = $region69
    $region68: #{tpu_custom_call.1} parent=1 // pred_region
      %141 = dma.done [#allocation10], 1024
    $region69: #{tpu_custom_call.1} parent=1 // pred_fallthru
      _
    // Predicated region
    $region70: #{tpu_custom_call.1} parent=1 // pred_check
      _
    $region71: #{tpu_custom_call.1} parent=1 // pred_check_branch
      %143 = sbr.rel (0) target = $region73
    $region72: #{tpu_custom_call.1} parent=1 // pred_region
      %145 = dma.done [#allocation13], 1024
    $region73: #{tpu_custom_call.1} parent=1 // pred_fallthru
      _
    // Predicated region
    $region74: #{tpu_custom_call.1} parent=1 // pred_check
      _
    $region75: #{tpu_custom_call.1} parent=1 // pred_check_branch
      %147 = sbr.rel (0) target = $region77
    $region76: #{tpu_custom_call.1} parent=1 // pred_region
      %149 = dma.done [#allocation13], 1024
    $region77: #{tpu_custom_call.1} parent=1 // pred_fallthru
      _
    %p150 = scmp.eq.s32.totalorder 0, 0
    // Predicated region
    $region78: #{tpu_custom_call.1} parent=1 // pred_check
      %p151 = pneg %p150
    $region79: #{tpu_custom_call.1} parent=1 // pred_check_branch
      %153 = sbr.rel (%p151) target = $region81
    $region80: #{tpu_custom_call.1} parent=1 // pred_region
      %v154 = vld [vmem:[#allocation6] sm:$0xff]
      %vm155 = vcmask 523264
      %156 = vst.msk [vmem:[#allocation2] sm:$0xff] %vm155, %v154
    $region81: #{tpu_custom_call.1} parent=1 // pred_fallthru
      _
    %v157 = vld [vmem:[#allocation2] sm:$0xff]
    %v158 = vld [vmem:[#allocation3] sm:$0xff]
    %v159 = vld [vmem:[#allocation8] sm:$0xff]
    %v160 = vld [vmem:[#allocation8 + $0x8] sm:$0xff]
    %v161 = vld [vmem:[#allocation8 + $0x10] sm:$0xff]
    %v162 = vld [vmem:[#allocation8 + $0x18] sm:$0xff]
    %v163 = vld [vmem:[#allocation8 + $0x20] sm:$0xff]
    %v164 = vld [vmem:[#allocation8 + $0x28] sm:$0xff]
    %v165 = vld [vmem:[%s3] sm:$0x1]
    %v167 = vperm.slane %v165, 0
    %vm169 = vcmask 392192
    %v171 = vsel %vm169, %v158, 0
    %173 = vmatpush.msra.mxu0 0.0
    %174 = vmatpush.msra.mxu0 0.0
    %175 = vmatpush.msra.mxu0 0.0
    %176 = vmatpush.msra.mxu0 0.0
    %177 = vmatpush.msra.mxu0 0.0
    %178 = vmatpush.msra.mxu0 0.0
    %179 = vmatpush.msra.mxu0 0.0
    %180 = vmatpush.msra.mxu0 0.0
    %181 = vmatpush.msra.mxu0 0.0
    %182 = vmatpush.msra.mxu0 0.0
    %183 = vmatpush.msra.mxu0 %v164
    %184 = vmatpush.msra.mxu0 %v163
    %185 = vmatpush.msra.mxu0 %v162
    %186 = vmatpush.msra.mxu0 %v161
    %187 = vmatpush.msra.mxu0 %v160
    %188 = vmatpush.msra.mxu0 %v159
    %189 = vmatmul.f32.gmra.mxu0 %v171
    %v190 = vpop.f32.mrf.mxu0
    %v191 = vadd.f32 %v167, %v190
    %192 = vdwg.mxu0
    %v193 = vmax.f32 %v191, 0.0
    %195 = vrot.lane.b32.xlu0 %v157, 64
    %v196 = vpop.permute.xlu0 %195
    %vm198 = vcmask 523264
    %v199 = vsel %vm198, %v193, %v196
    %v200 = vld [vmem:[#allocation9] sm:$0xff]
    %v201 = vld [vmem:[#allocation9 + $0x8] sm:$0xff]
    %v202 = vld [vmem:[#allocation9 + $0x10] sm:$0xff]
    %v203 = vld [vmem:[#allocation9 + $0x18] sm:$0xff]
    %v204 = vld [vmem:[#allocation9 + $0x20] sm:$0xff]
    %v205 = vld [vmem:[#allocation9 + $0x28] sm:$0xff]
    %v206 = vld [vmem:[#allocation9 + $0x30] sm:$0xff]
    %v207 = vld [vmem:[#allocation9 + $0x38] sm:$0xff]
    %v208 = vld [vmem:[#allocation9 + $0x40] sm:$0xff]
    %v209 = vld [vmem:[#allocation9 + $0x48] sm:$0xff]
    %v210 = vld [vmem:[#allocation9 + $0x50] sm:$0xff]
    %v211 = vld [vmem:[#allocation9 + $0x58] sm:$0xff]
    %v212 = vld [vmem:[#allocation9 + $0x60] sm:$0xff]
    %v213 = vld [vmem:[#allocation9 + $0x68] sm:$0xff]
    %v214 = vld [vmem:[#allocation9 + $0x70] sm:$0xff]
    %v215 = vld [vmem:[#allocation9 + $0x78] sm:$0xff]
    %v216 = vld [vmem:[%s5] sm:$0x1]
    %v218 = vperm.slane %v216, 0
    %220 = vmatpush.msra.mxu0 %v215
    %221 = vmatpush.msra.mxu0 %v214
    %222 = vmatpush.msra.mxu0 %v213
    %223 = vmatpush.msra.mxu0 %v212
    %224 = vmatpush.msra.mxu0 %v211
    %225 = vmatpush.msra.mxu0 %v210
    %226 = vmatpush.msra.mxu0 %v209
    %227 = vmatpush.msra.mxu0 %v208
    %228 = vmatpush.msra.mxu0 %v207
    %229 = vmatpush.msra.mxu0 %v206
    %230 = vmatpush.msra.mxu0 %v205
    %231 = vmatpush.msra.mxu0 %v204
    %232 = vmatpush.msra.mxu0 %v203
    %233 = vmatpush.msra.mxu0 %v202
    %234 = vmatpush.msra.mxu0 %v201
    %235 = vmatpush.msra.mxu0 %v200
    %236 = vmatmul.f32.gmra.mxu0 %v199
    %v237 = vpop.f32.mrf.mxu0
    %v238 = vadd.f32 %v218, %v237
    %239 = vdwg.mxu0
    %v240 = vxor.u32 %v238, 2147483648
    %v241 = vmul.f32 %v240, 1.442695
    %v242 = vpow.pop %v241
    %v243 = vadd.f32 %v242, 1.0
    %v244 = vrcp.pop %v243
    %v245 = vmul.f32 %v243, %v244
    %v246 = vsub.f32 1.0, %v245
    %v247 = vmul.f32 %v244, %v246
    %v248 = vadd.f32 %v244, %v247
    %vm249 = vweird.f32 %v243
    %vm250 = vweird.f32 %v244
    %vm251 = vmor %vm249, %vm250
    %v252 = vsel %vm251, %v244, %v248
    %v253 = vand.u32 2147483647, %v243
    %vm254 = vcmp.eq.f32.partialorder %v253, 8.507059e+37
    %v255 = vand.u32 %v243, 2147483648
    %v256 = vor.u32 1.1754944e-38, %v255
    %v257 = vsel %vm254, %v256, %v252
    %v258 = vmul.f32 1.0, %v257
    %v259 = vld [vmem:[#allocation11] sm:$0xff]
    %v260 = vld [vmem:[#allocation11 + $0x8] sm:$0xff]
    %v261 = vld [vmem:[#allocation11 + $0x10] sm:$0xff]
    %v262 = vld [vmem:[#allocation11 + $0x18] sm:$0xff]
    %v263 = vld [vmem:[#allocation11 + $0x20] sm:$0xff]
    %v264 = vld [vmem:[#allocation11 + $0x28] sm:$0xff]
    %v265 = vld [vmem:[#allocation11 + $0x30] sm:$0xff]
    %v266 = vld [vmem:[#allocation11 + $0x38] sm:$0xff]
    %v267 = vld [vmem:[%s7] sm:$0x1]
    %v269 = vperm.slane %v267, 0
    %v272 = vsel %vm198, %v193, 0
    %274 = vmatpush.msra.mxu0 0.0
    %275 = vmatpush.msra.mxu0 0.0
    %276 = vmatpush.msra.mxu0 0.0
    %277 = vmatpush.msra.mxu0 0.0
    %278 = vmatpush.msra.mxu0 0.0
    %279 = vmatpush.msra.mxu0 0.0
    %280 = vmatpush.msra.mxu0 0.0
    %281 = vmatpush.msra.mxu0 0.0
    %282 = vmatpush.msra.mxu0 %v266
    %283 = vmatpush.msra.mxu0 %v265
    %284 = vmatpush.msra.mxu0 %v264
    %285 = vmatpush.msra.mxu0 %v263
    %286 = vmatpush.msra.mxu0 %v262
    %287 = vmatpush.msra.mxu0 %v261
    %288 = vmatpush.msra.mxu0 %v260
    %289 = vmatpush.msra.mxu0 %v259
    %290 = vmatmul.f32.gmra.mxu0 %v272
    %v291 = vpop.f32.mrf.mxu0
    %v292 = vadd.f32 %v269, %v291
    %293 = vdwg.mxu0
    %v294 = vld [vmem:[#allocation12] sm:$0xff]
    %v295 = vld [vmem:[#allocation12 + $0x8] sm:$0xff]
    %v296 = vld [vmem:[#allocation12 + $0x10] sm:$0xff]
    %v297 = vld [vmem:[#allocation12 + $0x18] sm:$0xff]
    %v298 = vld [vmem:[#allocation12 + $0x20] sm:$0xff]
    %v299 = vld [vmem:[#allocation12 + $0x28] sm:$0xff]
    %v300 = vld [vmem:[#allocation12 + $0x30] sm:$0xff]
    %v301 = vld [vmem:[#allocation12 + $0x38] sm:$0xff]
    %v302 = vld [vmem:[%s9] sm:$0x1]
    %v304 = vperm.slane %v302, 0
    %v306 = vsel %vm198, %v157, 0
    %308 = vmatpush.msra.mxu0 0.0
    %309 = vmatpush.msra.mxu0 0.0
    %310 = vmatpush.msra.mxu0 0.0
    %311 = vmatpush.msra.mxu0 0.0
    %312 = vmatpush.msra.mxu0 0.0
    %313 = vmatpush.msra.mxu0 0.0
    %314 = vmatpush.msra.mxu0 0.0
    %315 = vmatpush.msra.mxu0 0.0
    %316 = vmatpush.msra.mxu0 %v301
    %317 = vmatpush.msra.mxu0 %v300
    %318 = vmatpush.msra.mxu0 %v299
    %319 = vmatpush.msra.mxu0 %v298
    %320 = vmatpush.msra.mxu0 %v297
    %321 = vmatpush.msra.mxu0 %v296
    %322 = vmatpush.msra.mxu0 %v295
    %323 = vmatpush.msra.mxu0 %v294
    %324 = vmatmul.f32.gmra.mxu0 %v306
    %v325 = vpop.f32.mrf.mxu0
    %v326 = vadd.f32 %v304, %v325
    %327 = vdwg.mxu0
    %v328 = vmul.f32 %v258, %v326
    %v329 = vadd.f32 %v292, %v328
    %v330 = vtanh.pop %v329
    %v331 = vsub.f32 1.0, %v258
    %333 = vrot.lane.b32.xlu0 %v330, 64
    %v334 = vpop.permute.xlu0 %333
    %v336 = vmul.f32 %v331, %v334
    %v337 = vmul.f32 %v258, %v196
    %v338 = vadd.f32 %v336, %v337
    %340 = vrot.lane.b32.xlu0 %v338, 64
    %v341 = vpop.permute.xlu0 %340
    %343 = vst.msk [vmem:[#allocation2] sm:$0xff] %vm198, %v341
    %v344 = vld [vmem:[#allocation14] sm:$0xff]
    %v345 = vld [vmem:[#allocation14 + $0x8] sm:$0xff]
    %v346 = vld [vmem:[#allocation14 + $0x10] sm:$0xff]
    %v347 = vld [vmem:[#allocation14 + $0x18] sm:$0xff]
    %v348 = vld [vmem:[#allocation14 + $0x20] sm:$0xff]
    %v349 = vld [vmem:[#allocation14 + $0x28] sm:$0xff]
    %v350 = vld [vmem:[#allocation14 + $0x30] sm:$0xff]
    %v351 = vld [vmem:[#allocation14 + $0x38] sm:$0xff]
    %v352 = vld [vmem:[%s11] sm:$0x1]
    %v354 = vperm.slane %v352, 0
    %v356 = vsel %vm198, %v341, 0
    %358 = vmatpush.msra.mxu0 0.0
    %359 = vmatpush.msra.mxu0 0.0
    %360 = vmatpush.msra.mxu0 0.0
    %361 = vmatpush.msra.mxu0 0.0
    %362 = vmatpush.msra.mxu0 0.0
    %363 = vmatpush.msra.mxu0 0.0
    %364 = vmatpush.msra.mxu0 0.0
    %365 = vmatpush.msra.mxu0 0.0
    %366 = vmatpush.msra.mxu0 %v351
    %367 = vmatpush.msra.mxu0 %v350
    %368 = vmatpush.msra.mxu0 %v349
    %369 = vmatpush.msra.mxu0 %v348
    %370 = vmatpush.msra.mxu0 %v347
    %371 = vmatpush.msra.mxu0 %v346
    %372 = vmatpush.msra.mxu0 %v345
    %373 = vmatpush.msra.mxu0 %v344
    %374 = vmatmul.f32.gmra.mxu0 %v356
    %v375 = vpop.f32.mrf.mxu0
    %v376 = vadd.f32 %v354, %v375
    %377 = vdwg.mxu0
    %378 = vst [vmem:[#allocation15] sm:$0xff] %v376
    // Predicated region
    $region82: #{tpu_custom_call.1} parent=1 // pred_check
      %p379 = pneg %p150
    $region83: #{tpu_custom_call.1} parent=1 // pred_check_branch
      %381 = sbr.rel (%p379) target = $region85
    $region84: #{tpu_custom_call.1} parent=1 // pred_region
      %382 = vst.msk [vmem:[#allocation16] sm:$0xff] %vm198, %v341
    $region85: #{tpu_custom_call.1} parent=1 // pred_fallthru
      _
    // Predicated region
    $region86: #{tpu_custom_call.1} parent=1 // pred_check
      _
    $region87: #{tpu_custom_call.1} parent=1 // pred_check_branch
      %384 = sbr.rel (0) target = $region89
    $region88: #{tpu_custom_call.1} parent=1 // pred_region
      %386 = vsyncadd [#allocation5], 0
      %s388 = sshll.u32 [#allocation15], 4
      %s389 = int_to_ptr.vmem [resolvable:$true] %s388
      %s390 = sshll.u32 %s12, 4
      %s391 = int_to_ptr.hbm [resolvable:$true] %s390
      %393 = dma.vmem_to_hbm [thread:$0]  %s389, 128, %s391, [#allocation5]
    $region89: #{tpu_custom_call.1} parent=1 // pred_fallthru
      _
    // Predicated region
    $region90: #{tpu_custom_call.1} parent=1 // pred_check
      _
    $region91: #{tpu_custom_call.1} parent=1 // pred_check_branch
      %395 = sbr.rel (0) target = $region93
    $region92: #{tpu_custom_call.1} parent=1 // pred_region
      %397 = vsyncadd [#allocation17], 0
      %s399 = sshll.u32 [#allocation16], 4
      %s400 = int_to_ptr.vmem [resolvable:$true] %s399
      %s401 = sshll.u32 %s13, 4
      %s402 = int_to_ptr.hbm [resolvable:$true] %s401
      %404 = dma.vmem_to_hbm [thread:$0]  %s400, 128, %s402, [#allocation17]
    $region93: #{tpu_custom_call.1} parent=1 // pred_fallthru
      _
    // Predicated region
    $region94: #{tpu_custom_call.1} parent=1 // pred_check
      _
    $region95: #{tpu_custom_call.1} parent=1 // pred_check_branch
      %406 = sbr.rel (0) target = $region97
    $region96: #{tpu_custom_call.1} parent=1 // pred_region
      %408 = dma.done [#allocation5], 128
    $region97: #{tpu_custom_call.1} parent=1 // pred_fallthru
      _
    // Predicated region
    $region98: #{tpu_custom_call.1} parent=1 // pred_check
      _
    $region99: #{tpu_custom_call.1} parent=1 // pred_check_branch
      %410 = sbr.rel (0) target = $region101
    $region100: #{tpu_custom_call.1} parent=1 // pred_region
      %412 = dma.done [#allocation17], 128
    $region101: #{tpu_custom_call.1} parent=1 // pred_fallthru
      _
    %413 = vsyncpa [#allocation4], 1
    %414 = vsyncpa [#allocation7], 1
    %415 = vsyncpa [#allocation10], 1
    %416 = vsyncpa [#allocation13], 1
    %417 = vsyncpa [#allocation5], 1
    %418 = vsyncpa [#allocation17], 1

</llo_original>
